<compile_context>
chip_gen: v7x
topology: tpu7x:2x2x1
jax: 0.10.0
libtpu: 0.0.40
codegen_flags: <defaults>
</compile_context>

<pallas_src>
import functools

import jax
import jax.numpy as jnp
from jax.experimental import pallas as pl
from jax.experimental.pallas import tpu as pltpu


def _mlp_kernel(x_ref,              # (2, block_n)      x^T tile
                w1a_ref, w1b_ref,   # (50, 1), (50, 1)  columns of W1
                b1_ref,             # (50, 1)
                w2_ref, b2_ref,     # (50, 50), (50, 1)
                w3_ref, b3_ref,     # (50, 50), (50, 1)
                w4_ref, b4_ref,     # (50, 1), (1, 1)
                o_ref):             # (1, block_n)
    xT = x_ref[...]                                  # (2, bn) f32

    # Layer 1 on the VPU: h[i, n] = w1[i,0]*x0[n] + w1[i,1]*x1[n] + b1[i].
    h = jnp.tanh(w1a_ref[...] * xT[0:1, :]
                 + w1b_ref[...] * xT[1:2, :]
                 + b1_ref[...])                      # (50, bn)

    # Layers 2 and 3 on the MXU, f32 accumulation; tanh runs on the EUP.
    h = jnp.tanh(jnp.dot(w2_ref[...], h,
                         preferred_element_type=jnp.float32) + b2_ref[...])
    h = jnp.tanh(jnp.dot(w3_ref[...], h,
                         preferred_element_type=jnp.float32) + b3_ref[...])

    # Layer 4: VPU broadcast-multiply + sublane (XLU) reduction -> (1, bn).
    out = jnp.sum(h * w4_ref[...], axis=0, keepdims=True) + b4_ref[...]
    o_ref[...] = out.astype(o_ref.dtype)


@functools.partial(jax.jit, static_argnames=("block_n",))
def eos_mlp_forward(x, params, *, block_n=1024):
    """x: (N, 2) -> logits: (N, 1). Matches EOSNeuralNetwork.forward.

    params are PyTorch-style: weights (out_features, in_features),
    biases (out_features,).

    block_n batch elements (lanes) are processed per grid step (must be a
    multiple of 128).  The batch is padded up to a multiple of block_n
    internally.  On v7x pick block_n so the grid has >= 2 steps (2 TCs/chip).
    """
    w1, b1, w2, b2, w3, b3, w4, b4 = params
    n, d_in = x.shape
    assert d_in == 2
    assert block_n % 128 == 0, "block_n must be a multiple of 128 lanes"

    f32 = jnp.float32

    # Pad batch and put it on the lane axis: x^T -> (2, n_pad).
    n_pad = pl.cdiv(n, block_n) * block_n
    xT = jnp.pad(jnp.transpose(x.astype(f32)), ((0, 0), (0, n_pad - n)))

    # W1 split into its two columns; biases as (out, 1) columns; layer-4
    # weight as a (50, 1) column.  All tiny, done once in the wrapper.
    w1a = w1[:, 0:1].astype(f32)                     # (50, 1)
    w1b = w1[:, 1:2].astype(f32)                     # (50, 1)
    b1c = b1.reshape(50, 1).astype(f32)
    b2c = b2.reshape(50, 1).astype(f32)
    b3c = b3.reshape(50, 1).astype(f32)
    w4c = jnp.transpose(w4).astype(f32)              # (1, 50) -> (50, 1)
    b4c = b4.reshape(1, 1).astype(f32)

    grid = (n_pad // block_n,)

    # Weight / bias blocks are the full (tiny) arrays, same block every step,
    # so the pipeline only DMAs them once.
    full = lambda shape: pl.BlockSpec(shape, lambda i: (0, 0))

    out_t = pl.pallas_call(
        _mlp_kernel,
        out_shape=jax.ShapeDtypeStruct((1, n_pad), x.dtype),
        grid_spec=pltpu.PrefetchScalarGridSpec(
            num_scalar_prefetch=0,
            grid=grid,
            in_specs=[
                pl.BlockSpec((2, block_n), lambda i: (0, i)),   # x^T tile
                full((50, 1)), full((50, 1)), full((50, 1)),    # layer 1
                full((50, 50)), full((50, 1)),                  # layer 2
                full((50, 50)), full((50, 1)),                  # layer 3
                full((50, 1)), full((1, 1)),                    # layer 4
            ],
            out_specs=pl.BlockSpec((1, block_n), lambda i: (0, i)),
        ),
        compiler_params=pltpu.CompilerParams(
            dimension_semantics=("parallel",)),
    )(xT, w1a, w1b, b1c,
      w2.astype(f32), b2c,
      w3.astype(f32), b3c,
      w4c, b4c)

    # (1, n_pad) lane-dense slab -> (N, 1), padding sliced off.  The transpose
    # of a (1, N) array is layout-free (pure reshape).
    return jnp.transpose(out_t[:, :n]).astype(x.dtype)


def init_params(key, dtype=jnp.float32):
    """PyTorch nn.Linear-style init: W (out, in), b (out,), U(+/- 1/sqrt(fan_in))."""
    sizes = [(2, 50), (50, 50), (50, 50), (50, 1)]
    params = []
    for fan_in, fan_out in sizes:
        key, kw, kb = jax.random.split(key, 3)
        bound = 1.0 / jnp.sqrt(fan_in)
        w = jax.random.uniform(kw, (fan_out, fan_in), dtype, -bound, bound)
        b = jax.random.uniform(kb, (fan_out,), dtype, -bound, bound)
        params += [w, b]
    return tuple(params)


def reference_forward(x, params):
    w1, b1, w2, b2, w3, b3, w4, b4 = params
    h = jnp.tanh(x @ w1.T + b1)
    h = jnp.tanh(h @ w2.T + b2)
    h = jnp.tanh(h @ w3.T + b3)
    return h @ w4.T + b4


if __name__ == "__main__":
    key = jax.random.PRNGKey(0)
    kx, kp = jax.random.split(key)

    # Small demo: batch=300 (not a multiple of the block) with block_n=256
    # -> padded to 512 lanes, grid of 2 parallel steps (exercises padding and
    # megacore sharding on v7x).
    batch = 300
    x = jax.random.normal(kx, (batch, 2), dtype=jnp.float32)
    params = init_params(kp, dtype=jnp.float32)

    out = eos_mlp_forward(x, params, block_n=256)
    out = jax.block_until_ready(out)

    ref = reference_forward(x, params)
    assert out.shape == (batch, 1)
    assert jnp.allclose(out, ref, atol=1e-5, rtol=1e-5), "mismatch vs reference"

    print("KERNEL_OK")
</pallas_src>

<mosaic_0001>
module attributes {stable_mosaic.version = 11 : i64} {
  func.func @_mlp_kernel(%arg0: i32, %arg1: memref<2x256xf32, #tpu.memory_space<vmem>>, %arg2: memref<50x1xf32, #tpu.memory_space<vmem>>, %arg3: memref<50x1xf32, #tpu.memory_space<vmem>>, %arg4: memref<50x1xf32, #tpu.memory_space<vmem>>, %arg5: memref<50x50xf32, #tpu.memory_space<vmem>>, %arg6: memref<50x1xf32, #tpu.memory_space<vmem>>, %arg7: memref<50x50xf32, #tpu.memory_space<vmem>>, %arg8: memref<50x1xf32, #tpu.memory_space<vmem>>, %arg9: memref<50x1xf32, #tpu.memory_space<vmem>>, %arg10: memref<1x1xf32, #tpu.memory_space<vmem>>, %arg11: memref<1x256xf32, #tpu.memory_space<vmem>>) attributes {dimension_semantics = [#tpu.dimension_semantics<parallel>], iteration_bounds = array<i64: 2>, scalar_prefetch = 0 : i64, scratch_operands = 0 : i64, tpu.core_type = #tpu.core_type<tc>, window_params = [{transform_indices = @transform_0, window_bounds = array<i64: 2, 256>}, {pipeline_mode = #tpu.pipeline_mode<synchronous>, transform_indices = @transform_1, window_bounds = array<i64: 50, 1>}, {pipeline_mode = #tpu.pipeline_mode<synchronous>, transform_indices = @transform_2, window_bounds = array<i64: 50, 1>}, {pipeline_mode = #tpu.pipeline_mode<synchronous>, transform_indices = @transform_3, window_bounds = array<i64: 50, 1>}, {pipeline_mode = #tpu.pipeline_mode<synchronous>, transform_indices = @transform_4, window_bounds = array<i64: 50, 50>}, {pipeline_mode = #tpu.pipeline_mode<synchronous>, transform_indices = @transform_5, window_bounds = array<i64: 50, 1>}, {pipeline_mode = #tpu.pipeline_mode<synchronous>, transform_indices = @transform_6, window_bounds = array<i64: 50, 50>}, {pipeline_mode = #tpu.pipeline_mode<synchronous>, transform_indices = @transform_7, window_bounds = array<i64: 50, 1>}, {pipeline_mode = #tpu.pipeline_mode<synchronous>, transform_indices = @transform_8, window_bounds = array<i64: 50, 1>}, {pipeline_mode = #tpu.pipeline_mode<synchronous>, transform_indices = @transform_9, window_bounds = array<i64: 1, 1>}, {transform_indices = @transform_10, window_bounds = array<i64: 1, 256>}]} {
    %c0 = arith.constant 0 : index
    %c0_0 = arith.constant 0 : index
    %0 = vector.load %arg1[%c0, %c0_0] : memref<2x256xf32, #tpu.memory_space<vmem>>, vector<2x256xf32>
    %c0_1 = arith.constant 0 : index
    %c0_2 = arith.constant 0 : index
    %1 = vector.load %arg2[%c0_1, %c0_2] : memref<50x1xf32, #tpu.memory_space<vmem>>, vector<50x1xf32>
    %2 = vector.extract_strided_slice %0 {offsets = [0, 0], sizes = [1, 256], strides = [1, 1]} : vector<2x256xf32> to vector<1x256xf32>
    %3 = vector.broadcast %1 : vector<50x1xf32> to vector<50x256xf32>
    %4 = vector.broadcast %2 : vector<1x256xf32> to vector<50x256xf32>
    %5 = arith.mulf %3, %4 : vector<50x256xf32>
    %c0_3 = arith.constant 0 : index
    %c0_4 = arith.constant 0 : index
    %6 = vector.load %arg3[%c0_3, %c0_4] : memref<50x1xf32, #tpu.memory_space<vmem>>, vector<50x1xf32>
    %7 = vector.extract_strided_slice %0 {offsets = [1, 0], sizes = [1, 256], strides = [1, 1]} : vector<2x256xf32> to vector<1x256xf32>
    %8 = vector.broadcast %6 : vector<50x1xf32> to vector<50x256xf32>
    %9 = vector.broadcast %7 : vector<1x256xf32> to vector<50x256xf32>
    %10 = arith.mulf %8, %9 : vector<50x256xf32>
    %11 = arith.addf %5, %10 : vector<50x256xf32>
    %c0_5 = arith.constant 0 : index
    %c0_6 = arith.constant 0 : index
    %12 = vector.load %arg4[%c0_5, %c0_6] : memref<50x1xf32, #tpu.memory_space<vmem>>, vector<50x1xf32>
    %13 = vector.broadcast %12 : vector<50x1xf32> to vector<50x256xf32>
    %14 = arith.addf %11, %13 : vector<50x256xf32>
    %15 = math.tanh %14 : vector<50x256xf32>
    %c0_7 = arith.constant 0 : index
    %c0_8 = arith.constant 0 : index
    %16 = vector.load %arg5[%c0_7, %c0_8] : memref<50x50xf32, #tpu.memory_space<vmem>>, vector<50x50xf32>
    %cst = arith.constant dense<0.000000e+00> : vector<50x256xf32>
    %17 = tpu.matmul %16, %15, %cst {dimension_numbers = #tpu.dot_dimension_numbers<[1], [0], [0], [1], [0, 0, 1, 1], [], []>} : vector<50x50xf32>, vector<50x256xf32>, vector<50x256xf32> -> vector<50x256xf32>
    %c0_9 = arith.constant 0 : index
    %c0_10 = arith.constant 0 : index
    %18 = vector.load %arg6[%c0_9, %c0_10] : memref<50x1xf32, #tpu.memory_space<vmem>>, vector<50x1xf32>
    %19 = vector.broadcast %18 : vector<50x1xf32> to vector<50x256xf32>
    %20 = arith.addf %17, %19 : vector<50x256xf32>
    %21 = math.tanh %20 : vector<50x256xf32>
    %c0_11 = arith.constant 0 : index
    %c0_12 = arith.constant 0 : index
    %22 = vector.load %arg7[%c0_11, %c0_12] : memref<50x50xf32, #tpu.memory_space<vmem>>, vector<50x50xf32>
    %cst_13 = arith.constant dense<0.000000e+00> : vector<50x256xf32>
    %23 = tpu.matmul %22, %21, %cst_13 {dimension_numbers = #tpu.dot_dimension_numbers<[1], [0], [0], [1], [0, 0, 1, 1], [], []>} : vector<50x50xf32>, vector<50x256xf32>, vector<50x256xf32> -> vector<50x256xf32>
    %c0_14 = arith.constant 0 : index
    %c0_15 = arith.constant 0 : index
    %24 = vector.load %arg8[%c0_14, %c0_15] : memref<50x1xf32, #tpu.memory_space<vmem>>, vector<50x1xf32>
    %25 = vector.broadcast %24 : vector<50x1xf32> to vector<50x256xf32>
    %26 = arith.addf %23, %25 : vector<50x256xf32>
    %27 = math.tanh %26 : vector<50x256xf32>
    %c0_16 = arith.constant 0 : index
    %c0_17 = arith.constant 0 : index
    %28 = vector.load %arg9[%c0_16, %c0_17] : memref<50x1xf32, #tpu.memory_space<vmem>>, vector<50x1xf32>
    %29 = vector.broadcast %28 : vector<50x1xf32> to vector<50x256xf32>
    %30 = arith.mulf %27, %29 : vector<50x256xf32>
    %cst_18 = arith.constant dense<0.000000e+00> : vector<256xf32>
    %31 = vector.multi_reduction <add>, %30, %cst_18 [0] : vector<50x256xf32> to vector<256xf32>
    %32 = vector.shape_cast %31 : vector<256xf32> to vector<1x256xf32>
    %c0_19 = arith.constant 0 : index
    %c0_20 = arith.constant 0 : index
    %33 = vector.load %arg10[%c0_19, %c0_20] : memref<1x1xf32, #tpu.memory_space<vmem>>, vector<1x1xf32>
    %34 = vector.broadcast %33 : vector<1x1xf32> to vector<1x256xf32>
    %35 = arith.addf %32, %34 : vector<1x256xf32>
    %c0_21 = arith.constant 0 : index
    %c0_22 = arith.constant 0 : index
    %36 = vector.load %arg11[%c0_21, %c0_22] : memref<1x256xf32, #tpu.memory_space<vmem>>, vector<1x256xf32>
    tpu.vector_store %arg11[%c0_21, %c0_22], %35 {strides = array<i32>} : memref<1x256xf32, #tpu.memory_space<vmem>>, vector<1x256xf32>,
    return
  }
  func.func @transform_0(%arg0: i32) -> (i32, i32) {
    %c0_i32 = arith.constant 0 : i32
    %c0_i32_0 = arith.constant 0 : i32
    return %c0_i32, %arg0 : i32, i32
  }
  func.func @transform_1(%arg0: i32) -> (i32, i32) {
    %c0_i32 = arith.constant 0 : i32
    %c0_i32_0 = arith.constant 0 : i32
    %c0_i32_1 = arith.constant 0 : i32
    return %c0_i32, %c0_i32_0 : i32, i32
  }
  func.func @transform_2(%arg0: i32) -> (i32, i32) {
    %c0_i32 = arith.constant 0 : i32
    %c0_i32_0 = arith.constant 0 : i32
    %c0_i32_1 = arith.constant 0 : i32
    return %c0_i32, %c0_i32_0 : i32, i32
  }
  func.func @transform_3(%arg0: i32) -> (i32, i32) {
    %c0_i32 = arith.constant 0 : i32
    %c0_i32_0 = arith.constant 0 : i32
    %c0_i32_1 = arith.constant 0 : i32
    return %c0_i32, %c0_i32_0 : i32, i32
  }
  func.func @transform_4(%arg0: i32) -> (i32, i32) {
    %c0_i32 = arith.constant 0 : i32
    %c0_i32_0 = arith.constant 0 : i32
    %c0_i32_1 = arith.constant 0 : i32
    return %c0_i32, %c0_i32_0 : i32, i32
  }
  func.func @transform_5(%arg0: i32) -> (i32, i32) {
    %c0_i32 = arith.constant 0 : i32
    %c0_i32_0 = arith.constant 0 : i32
    %c0_i32_1 = arith.constant 0 : i32
    return %c0_i32, %c0_i32_0 : i32, i32
  }
  func.func @transform_6(%arg0: i32) -> (i32, i32) {
    %c0_i32 = arith.constant 0 : i32
    %c0_i32_0 = arith.constant 0 : i32
    %c0_i32_1 = arith.constant 0 : i32
    return %c0_i32, %c0_i32_0 : i32, i32
  }
  func.func @transform_7(%arg0: i32) -> (i32, i32) {
    %c0_i32 = arith.constant 0 : i32
    %c0_i32_0 = arith.constant 0 : i32
    %c0_i32_1 = arith.constant 0 : i32
    return %c0_i32, %c0_i32_0 : i32, i32
  }
  func.func @transform_8(%arg0: i32) -> (i32, i32) {
    %c0_i32 = arith.constant 0 : i32
    %c0_i32_0 = arith.constant 0 : i32
    %c0_i32_1 = arith.constant 0 : i32
    return %c0_i32, %c0_i32_0 : i32, i32
  }
  func.func @transform_9(%arg0: i32) -> (i32, i32) {
    %c0_i32 = arith.constant 0 : i32
    %c0_i32_0 = arith.constant 0 : i32
    %c0_i32_1 = arith.constant 0 : i32
    return %c0_i32, %c0_i32_0 : i32, i32
  }
  func.func @transform_10(%arg0: i32) -> (i32, i32) {
    %c0_i32 = arith.constant 0 : i32
    %c0_i32_0 = arith.constant 0 : i32
    return %c0_i32, %arg0 : i32, i32
  }
}

</mosaic_0001>

<llo_original>
// kernel: eos_mlp_forward.1
$region0: #{eos_mlp_forward.1}
  #allocation0 [shape = 'u32[]', space=smem, size = 0x4, offset = 0x4, fixed_abs, tag = 'smem constant byte address 0x4 - core index']
  #allocation1 [shape = 'u32[144,128]{1,0:T(1,128)}', space=vmem, size = 0x12000, scoped, tag = 'internal scratch']
  #allocation2 [shape = 'f32[1,1]{1,0:T(1,128)S(1)}', space=vmem, size = 0x200, scoped, tag = 'scoped memory for eos_mlp_forward.1']
  %s0 = inlined_call_operand.vmem [shape: f32[2,512], index: 0, kind: input, shape index: {}]
  %s1 = inlined_call_operand.vmem [shape: f32[50,1], index: 1, kind: input, shape index: {}]
  %s2 = inlined_call_operand.vmem [shape: f32[50,1], index: 2, kind: input, shape index: {}]
  %s3 = inlined_call_operand.vmem [shape: f32[50,1], index: 3, kind: input, shape index: {}]
  %s4 = inlined_call_operand.vmem [shape: f32[50,50], index: 4, kind: input, shape index: {}]
  %s5 = inlined_call_operand.vmem [shape: f32[50,1], index: 5, kind: input, shape index: {}]
  %s6 = inlined_call_operand.vmem [shape: f32[50,50], index: 6, kind: input, shape index: {}]
  %s7 = inlined_call_operand.vmem [shape: f32[50,1], index: 7, kind: input, shape index: {}]
  %s8 = inlined_call_operand.vmem [shape: f32[50,1], index: 8, kind: input, shape index: {}]
  %s9 = inlined_call_operand.<no memory space> [shape: f32[1,1], index: 9, kind: input, shape index: {}]
  %s10 = inlined_call_operand.vmem [shape: f32[1,512], index: 10, kind: output, shape index: {}]
  %s11 = sld [smem:[#allocation0]]
  $region73: #{eos_mlp_forward.1} parent=0
    _
  %s13 = ssub.s32 1, %s11
  %s14 = scalar_select 0, %s13, %s11
  %v15 = vstv %s9
  %16 = vst [vmem:[#allocation2] sm:$0x1] %v15
  loop: start=0, step=1, limit=4
  $region2: #{eos_mlp_forward.1} parent=0 // loop_pre_header
    _
  $region3: #{eos_mlp_forward.1} parent=0 // loop_header
    %s18 = sphi 0, %s22
    %p19 = scmp.ge.s32.totalorder %s18, 4
    %s28 = sphi 0, %s30
    %s31 = sphi 0, %s28
    %s32 = sphi 0, %s31
    %s48 = sphi 0, %s32
    %s52 = sphi 0, %s52
    %s54 = sphi 0, %s52
    %s55 = sphi 0, %s54
    %s69 = sphi 0, %s55
    %s73 = sphi 0, %s73
    %s75 = sphi 0, %s73
    %s76 = sphi 0, %s75
    %s90 = sphi 0, %s76
    %s94 = sphi 0, %s94
    %s96 = sphi 0, %s94
    %s97 = sphi 0, %s96
    %s111 = sphi 0, %s97
    %s115 = sphi 0, %s115
    %s117 = sphi 0, %s115
    %s118 = sphi 0, %s117
    %s132 = sphi 0, %s118
    %s136 = sphi 0, %s136
    %s138 = sphi 0, %s136
    %s139 = sphi 0, %s138
    %s153 = sphi 0, %s139
    %s157 = sphi 0, %s157
    %s159 = sphi 0, %s157
    %s160 = sphi 0, %s159
    %s174 = sphi 0, %s160
    %s178 = sphi 0, %s178
    %s180 = sphi 0, %s178
    %s181 = sphi 0, %s180
    %s195 = sphi 0, %s181
    %s199 = sphi 0, %s199
    %s201 = sphi 0, %s199
    %s202 = sphi 0, %s201
    %s216 = sphi 0, %s202
    %s220 = sphi 0, %s220
    %s222 = sphi 0, %s220
    %s223 = sphi 0, %s222
    %s237 = sphi 0, %s223
    %s243 = sphi 0, %s245
    %s246 = sphi 0, %s243
    %s247 = sphi 0, %s246
    %s263 = sphi 0, %s247
  $region4: #{eos_mlp_forward.1} parent=0 // loop_header_branch
    %21 = sbr.rel (%p19) target = $region8
  $region5: #{eos_mlp_forward.1} parent=0 // loop_body
    %s23 = ssub.s32 %s18, 1
    %s24 = ssub.s32 %s18, 2
    %s25 = sadd.s32 %s18, 1
    %s26 = ssub.s32 %s18, %s25
    %p27 = scmp.eq.s32.totalorder %s26, 0
    %s29 = sadd.s32 %s28, 1
    %s30 = scalar_select %p27, %s28, %s29
    %p33 = pneg %p27
    %p34 = scmp.eq.s32.totalorder %s18, 1
    %p35 = por %p33, %p34
    %p36 = scmp.ne.s32.totalorder %s28, %s31
    %p37 = scmp.eq.s32.totalorder %s18, 0
    %p38 = por %p36, %p37
    %p39 = scmp.ne.s32.totalorder %s28, %s31
    %p40 = scmp.eq.s32.totalorder %s23, 1
    %p41 = por %p39, %p40
    %p42 = scmp.ne.s32.totalorder %s31, %s32
    %p43 = scmp.eq.s32.totalorder %s23, 0
    %p44 = por %p42, %p43
    %p45 = scmp.ne.s32.totalorder %s31, %s32
    %p46 = scmp.eq.s32.totalorder %s24, 1
    %p47 = por %p45, %p46
    %p49 = scmp.ne.s32.totalorder %s32, %s48
    %p50 = scmp.eq.s32.totalorder %s24, 0
    %p51 = por %p49, %p50
    %s53 = sadd.s32 %s52, 1
    %p56 = scmp.eq.s32.totalorder %s18, 1
    %p57 = scmp.ne.s32.totalorder %s52, %s54
    %p58 = scmp.eq.s32.totalorder %s18, 0
    %p59 = por %p57, %p58
    %p60 = scmp.ne.s32.totalorder %s52, %s54
    %p61 = scmp.eq.s32.totalorder %s23, 1
    %p62 = por %p60, %p61
    %p63 = scmp.ne.s32.totalorder %s54, %s55
    %p64 = scmp.eq.s32.totalorder %s23, 0
    %p65 = por %p63, %p64
    %p66 = scmp.ne.s32.totalorder %s54, %s55
    %p67 = scmp.eq.s32.totalorder %s24, 1
    %p68 = por %p66, %p67
    %p70 = scmp.ne.s32.totalorder %s55, %s69
    %p71 = scmp.eq.s32.totalorder %s24, 0
    %p72 = por %p70, %p71
    %s74 = sadd.s32 %s73, 1
    %p77 = scmp.eq.s32.totalorder %s18, 1
    %p78 = scmp.ne.s32.totalorder %s73, %s75
    %p79 = scmp.eq.s32.totalorder %s18, 0
    %p80 = por %p78, %p79
    %p81 = scmp.ne.s32.totalorder %s73, %s75
    %p82 = scmp.eq.s32.totalorder %s23, 1
    %p83 = por %p81, %p82
    %p84 = scmp.ne.s32.totalorder %s75, %s76
    %p85 = scmp.eq.s32.totalorder %s23, 0
    %p86 = por %p84, %p85
    %p87 = scmp.ne.s32.totalorder %s75, %s76
    %p88 = scmp.eq.s32.totalorder %s24, 1
    %p89 = por %p87, %p88
    %p91 = scmp.ne.s32.totalorder %s76, %s90
    %p92 = scmp.eq.s32.totalorder %s24, 0
    %p93 = por %p91, %p92
    %s95 = sadd.s32 %s94, 1
    %p98 = scmp.eq.s32.totalorder %s18, 1
    %p99 = scmp.ne.s32.totalorder %s94, %s96
    %p100 = scmp.eq.s32.totalorder %s18, 0
    %p101 = por %p99, %p100
    %p102 = scmp.ne.s32.totalorder %s94, %s96
    %p103 = scmp.eq.s32.totalorder %s23, 1
    %p104 = por %p102, %p103
    %p105 = scmp.ne.s32.totalorder %s96, %s97
    %p106 = scmp.eq.s32.totalorder %s23, 0
    %p107 = por %p105, %p106
    %p108 = scmp.ne.s32.totalorder %s96, %s97
    %p109 = scmp.eq.s32.totalorder %s24, 1
    %p110 = por %p108, %p109
    %p112 = scmp.ne.s32.totalorder %s97, %s111
    %p113 = scmp.eq.s32.totalorder %s24, 0
    %p114 = por %p112, %p113
    %s116 = sadd.s32 %s115, 1
    %p119 = scmp.eq.s32.totalorder %s18, 1
    %p120 = scmp.ne.s32.totalorder %s115, %s117
    %p121 = scmp.eq.s32.totalorder %s18, 0
    %p122 = por %p120, %p121
    %p123 = scmp.ne.s32.totalorder %s115, %s117
    %p124 = scmp.eq.s32.totalorder %s23, 1
    %p125 = por %p123, %p124
    %p126 = scmp.ne.s32.totalorder %s117, %s118
    %p127 = scmp.eq.s32.totalorder %s23, 0
    %p128 = por %p126, %p127
    %p129 = scmp.ne.s32.totalorder %s117, %s118
    %p130 = scmp.eq.s32.totalorder %s24, 1
    %p131 = por %p129, %p130
    %p133 = scmp.ne.s32.totalorder %s118, %s132
    %p134 = scmp.eq.s32.totalorder %s24, 0
    %p135 = por %p133, %p134
    %s137 = sadd.s32 %s136, 1
    %p140 = scmp.eq.s32.totalorder %s18, 1
    %p141 = scmp.ne.s32.totalorder %s136, %s138
    %p142 = scmp.eq.s32.totalorder %s18, 0
    %p143 = por %p141, %p142
    %p144 = scmp.ne.s32.totalorder %s136, %s138
    %p145 = scmp.eq.s32.totalorder %s23, 1
    %p146 = por %p144, %p145
    %p147 = scmp.ne.s32.totalorder %s138, %s139
    %p148 = scmp.eq.s32.totalorder %s23, 0
    %p149 = por %p147, %p148
    %p150 = scmp.ne.s32.totalorder %s138, %s139
    %p151 = scmp.eq.s32.totalorder %s24, 1
    %p152 = por %p150, %p151
    %p154 = scmp.ne.s32.totalorder %s139, %s153
    %p155 = scmp.eq.s32.totalorder %s24, 0
    %p156 = por %p154, %p155
    %s158 = sadd.s32 %s157, 1
    %p161 = scmp.eq.s32.totalorder %s18, 1
    %p162 = scmp.ne.s32.totalorder %s157, %s159
    %p163 = scmp.eq.s32.totalorder %s18, 0
    %p164 = por %p162, %p163
    %p165 = scmp.ne.s32.totalorder %s157, %s159
    %p166 = scmp.eq.s32.totalorder %s23, 1
    %p167 = por %p165, %p166
    %p168 = scmp.ne.s32.totalorder %s159, %s160
    %p169 = scmp.eq.s32.totalorder %s23, 0
    %p170 = por %p168, %p169
    %p171 = scmp.ne.s32.totalorder %s159, %s160
    %p172 = scmp.eq.s32.totalorder %s24, 1
    %p173 = por %p171, %p172
    %p175 = scmp.ne.s32.totalorder %s160, %s174
    %p176 = scmp.eq.s32.totalorder %s24, 0
    %p177 = por %p175, %p176
    %s179 = sadd.s32 %s178, 1
    %p182 = scmp.eq.s32.totalorder %s18, 1
    %p183 = scmp.ne.s32.totalorder %s178, %s180
    %p184 = scmp.eq.s32.totalorder %s18, 0
    %p185 = por %p183, %p184
    %p186 = scmp.ne.s32.totalorder %s178, %s180
    %p187 = scmp.eq.s32.totalorder %s23, 1
    %p188 = por %p186, %p187
    %p189 = scmp.ne.s32.totalorder %s180, %s181
    %p190 = scmp.eq.s32.totalorder %s23, 0
    %p191 = por %p189, %p190
    %p192 = scmp.ne.s32.totalorder %s180, %s181
    %p193 = scmp.eq.s32.totalorder %s24, 1
    %p194 = por %p192, %p193
    %p196 = scmp.ne.s32.totalorder %s181, %s195
    %p197 = scmp.eq.s32.totalorder %s24, 0
    %p198 = por %p196, %p197
    %s200 = sadd.s32 %s199, 1
    %p203 = scmp.eq.s32.totalorder %s18, 1
    %p204 = scmp.ne.s32.totalorder %s199, %s201
    %p205 = scmp.eq.s32.totalorder %s18, 0
    %p206 = por %p204, %p205
    %p207 = scmp.ne.s32.totalorder %s199, %s201
    %p208 = scmp.eq.s32.totalorder %s23, 1
    %p209 = por %p207, %p208
    %p210 = scmp.ne.s32.totalorder %s201, %s202
    %p211 = scmp.eq.s32.totalorder %s23, 0
    %p212 = por %p210, %p211
    %p213 = scmp.ne.s32.totalorder %s201, %s202
    %p214 = scmp.eq.s32.totalorder %s24, 1
    %p215 = por %p213, %p214
    %p217 = scmp.ne.s32.totalorder %s202, %s216
    %p218 = scmp.eq.s32.totalorder %s24, 0
    %p219 = por %p217, %p218
    %s221 = sadd.s32 %s220, 1
    %p224 = scmp.eq.s32.totalorder %s18, 1
    %p225 = scmp.ne.s32.totalorder %s220, %s222
    %p226 = scmp.eq.s32.totalorder %s18, 0
    %p227 = por %p225, %p226
    %p228 = scmp.ne.s32.totalorder %s220, %s222
    %p229 = scmp.eq.s32.totalorder %s23, 1
    %p230 = por %p228, %p229
    %p231 = scmp.ne.s32.totalorder %s222, %s223
    %p232 = scmp.eq.s32.totalorder %s23, 0
    %p233 = por %p231, %p232
    %p234 = scmp.ne.s32.totalorder %s222, %s223
    %p235 = scmp.eq.s32.totalorder %s24, 1
    %p236 = por %p234, %p235
    %p238 = scmp.ne.s32.totalorder %s223, %s237
    %p239 = scmp.eq.s32.totalorder %s24, 0
    %p240 = por %p238, %p239
    %s241 = ssub.s32 %s18, %s25
    %p242 = scmp.eq.s32.totalorder %s241, 0
    %s244 = sadd.s32 %s243, 1
    %s245 = scalar_select %p242, %s243, %s244
    %p248 = pneg %p242
    %p249 = scmp.eq.s32.totalorder %s18, 1
    %p250 = por %p248, %p249
    %p251 = scmp.ne.s32.totalorder %s243, %s246
    %p252 = scmp.eq.s32.totalorder %s18, 0
    %p253 = por %p251, %p252
    %p254 = scmp.ne.s32.totalorder %s243, %s246
    %p255 = scmp.eq.s32.totalorder %s23, 1
    %p256 = por %p254, %p255
    %p257 = scmp.ne.s32.totalorder %s246, %s247
    %p258 = scmp.eq.s32.totalorder %s23, 0
    %p259 = por %p257, %p258
    %p260 = scmp.ne.s32.totalorder %s246, %s247
    %p261 = scmp.eq.s32.totalorder %s24, 1
    %p262 = por %p260, %p261
    %p264 = scmp.ne.s32.totalorder %s247, %s263
    %p265 = scmp.eq.s32.totalorder %s24, 0
    %p266 = por %p264, %p265
    %p267 = scmp.le.s32.totalorder 1, %s18
    %p268 = scmp.lt.s32.totalorder %s18, 3
    %p269 = pnand %p267, %p268
    %p270 = pneg %p269
    // Predicated region
    $region9: #{eos_mlp_forward.1} parent=5 // pred_check
      _
    $region10: #{eos_mlp_forward.1} parent=5 // pred_check_branch
      %272 = sbr.rel (%p269) target = $region12
    $region11: #{eos_mlp_forward.1} parent=5 // pred_region
      %s273 = ssub.s32 %s18, 1
      // Predicated region
      $region13: #{eos_mlp_forward.1} parent=11 // pred_check
        %p274 = pneg %p65
      $region14: #{eos_mlp_forward.1} parent=11 // pred_check_branch
        %276 = sbr.rel (%p274) target = $region16
      $region15: #{eos_mlp_forward.1} parent=11 // pred_region
        _
      $region16: #{eos_mlp_forward.1} parent=11 // pred_fallthru
        _
      // Predicated region
      $region17: #{eos_mlp_forward.1} parent=11 // pred_check
        %p277 = pneg %p86
      $region18: #{eos_mlp_forward.1} parent=11 // pred_check_branch
        %279 = sbr.rel (%p277) target = $region20
      $region19: #{eos_mlp_forward.1} parent=11 // pred_region
        _
      $region20: #{eos_mlp_forward.1} parent=11 // pred_fallthru
        _
      // Predicated region
      $region21: #{eos_mlp_forward.1} parent=11 // pred_check
        %p280 = pneg %p107
      $region22: #{eos_mlp_forward.1} parent=11 // pred_check_branch
        %282 = sbr.rel (%p280) target = $region24
      $region23: #{eos_mlp_forward.1} parent=11 // pred_region
        _
      $region24: #{eos_mlp_forward.1} parent=11 // pred_fallthru
        _
      // Predicated region
      $region25: #{eos_mlp_forward.1} parent=11 // pred_check
        %p283 = pneg %p128
      $region26: #{eos_mlp_forward.1} parent=11 // pred_check_branch
        %285 = sbr.rel (%p283) target = $region28
      $region27: #{eos_mlp_forward.1} parent=11 // pred_region
        _
      $region28: #{eos_mlp_forward.1} parent=11 // pred_fallthru
        _
      // Predicated region
      $region29: #{eos_mlp_forward.1} parent=11 // pred_check
        %p286 = pneg %p149
      $region30: #{eos_mlp_forward.1} parent=11 // pred_check_branch
        %288 = sbr.rel (%p286) target = $region32
      $region31: #{eos_mlp_forward.1} parent=11 // pred_region
        _
      $region32: #{eos_mlp_forward.1} parent=11 // pred_fallthru
        _
      // Predicated region
      $region33: #{eos_mlp_forward.1} parent=11 // pred_check
        %p289 = pneg %p170
      $region34: #{eos_mlp_forward.1} parent=11 // pred_check_branch
        %291 = sbr.rel (%p289) target = $region36
      $region35: #{eos_mlp_forward.1} parent=11 // pred_region
        _
      $region36: #{eos_mlp_forward.1} parent=11 // pred_fallthru
        _
      // Predicated region
      $region37: #{eos_mlp_forward.1} parent=11 // pred_check
        %p292 = pneg %p191
      $region38: #{eos_mlp_forward.1} parent=11 // pred_check_branch
        %294 = sbr.rel (%p292) target = $region40
      $region39: #{eos_mlp_forward.1} parent=11 // pred_region
        _
      $region40: #{eos_mlp_forward.1} parent=11 // pred_fallthru
        _
      // Predicated region
      $region41: #{eos_mlp_forward.1} parent=11 // pred_check
        %p295 = pneg %p212
      $region42: #{eos_mlp_forward.1} parent=11 // pred_check_branch
        %297 = sbr.rel (%p295) target = $region44
      $region43: #{eos_mlp_forward.1} parent=11 // pred_region
        _
      $region44: #{eos_mlp_forward.1} parent=11 // pred_fallthru
        _
      // Predicated region
      $region45: #{eos_mlp_forward.1} parent=11 // pred_check
        %p298 = pneg %p233
      $region46: #{eos_mlp_forward.1} parent=11 // pred_check_branch
        %300 = sbr.rel (%p298) target = $region48
      $region47: #{eos_mlp_forward.1} parent=11 // pred_region
        _
      $region48: #{eos_mlp_forward.1} parent=11 // pred_fallthru
        _
    $region12: #{eos_mlp_forward.1} parent=5 // pred_fallthru
      _
    %p301 = scmp.lt.s32.totalorder %s18, 2
    // Predicated region
    $region49: #{eos_mlp_forward.1} parent=5 // pred_check
      %p302 = pneg %p301
    $region50: #{eos_mlp_forward.1} parent=5 // pred_check_branch
      %304 = sbr.rel (%p302) target = $region52
    $region51: #{eos_mlp_forward.1} parent=5 // pred_region
      // Predicated region
      $region53: #{eos_mlp_forward.1} parent=51 // pred_check
        %p305 = pneg %p38
      $region54: #{eos_mlp_forward.1} parent=51 // pred_check_branch
        %307 = sbr.rel (%p305) target = $region56
      $region55: #{eos_mlp_forward.1} parent=51 // pred_region
        %s308 = smul.u32 2, %s18
        %p309 = scmp.lt.s32.totalorder %s308, 3
        %s310 = scalar_select %p309, %s308, 3
        %s311 = smul.addr %s310, 2
        %s312 = scalar_lea.vmem %s0, %s311
        %s313 = smul.u32 2, %s18
      $region56: #{eos_mlp_forward.1} parent=51 // pred_fallthru
        _
    $region52: #{eos_mlp_forward.1} parent=5 // pred_fallthru
      _
    %p314 = scmp.le.s32.totalorder 1, %s18
    %p315 = scmp.lt.s32.totalorder %s18, 3
    %p316 = pnand %p314, %p315
    %p317 = pneg %p316
    // Predicated region
    $region57: #{eos_mlp_forward.1} parent=5 // pred_check
      _
    $region58: #{eos_mlp_forward.1} parent=5 // pred_check_branch
      %319 = sbr.rel (%p316) target = $region60
    $region59: #{eos_mlp_forward.1} parent=5 // pred_region
      %s320 = ssub.s32 %s18, 1
      %s321 = smul.u32 2, %s23
      %p322 = scmp.lt.s32.totalorder %s321, 3
      %s323 = scalar_select %p322, %s321, 3
      %s324 = smul.addr %s323, 2
      %s325 = scalar_lea.vmem %s0, %s324
      %p326 = pneg %p44
      %p327 = pneg %p41
      %p328 = pneg %p65
      %p329 = pneg %p62
      %p330 = pneg %p86
      %p331 = pneg %p83
      %p332 = pneg %p107
      %p333 = pneg %p104
      %p334 = pneg %p128
      %p335 = pneg %p125
      %p336 = pneg %p149
      %p337 = pneg %p146
      %p338 = pneg %p170
      %p339 = pneg %p167
      %p340 = pneg %p191
      %p341 = pneg %p188
      %p342 = pneg %p212
      %p343 = pneg %p209
      %p344 = pneg %p233
      %p345 = pneg %p230
      %p346 = pneg %p259
      %p347 = pneg %p256
      %s348 = smul.u32 2, %s23
      %p349 = scmp.lt.s32.totalorder %s348, 3
      %s350 = scalar_select %p349, %s348, 3
      %s351 = scalar_lea.vmem %s10, %s350
      %s352 = smul.u32 2, %s23
      %p353 = scmp.lt.s32.totalorder %s352, 3
      %s354 = scalar_select %p353, %s352, 3
      %s355 = smul.addr %s354, 2
      %s356 = scalar_lea.vmem %s0, %s355
      %s357 = smul.u32 2, %s23
      %s358 = smul.u32 2, %s23
      %p359 = scmp.lt.s32.totalorder %s358, 3
      %s360 = scalar_select %p359, %s358, 3
      %s361 = scalar_lea.vmem %s10, %s360
      %s362 = smul.u32 2, %s23
      %v363 = vld [vmem:[%s356] sm:$0xf]
      %v364 = vld [vmem:[%s1] sm:$0xff]
      %v365 = vld [vmem:[%s1 + $0x8] sm:$0xff]
      %v366 = vld [vmem:[%s1 + $0x10] sm:$0xff]
      %v367 = vld [vmem:[%s1 + $0x18] sm:$0xff]
      %v368 = vld [vmem:[%s1 + $0x20] sm:$0xff]
      %v369 = vld [vmem:[%s1 + $0x28] sm:$0xff]
      %v370 = vld [vmem:[%s1 + $0x30] sm:$0x3]
      %372 = vset.pattern.permute.xlu0 0
      %373 = vperm.xlu0 %372, %v364
      %v374 = vpop.permute.xlu0 %373
      %377 = vset.pattern.permute.xlu0 0
      %378 = vperm.xlu0 %377, %v365
      %v379 = vpop.permute.xlu0 %378
      %382 = vset.pattern.permute.xlu0 0
      %383 = vperm.xlu0 %382, %v366
      %v384 = vpop.permute.xlu0 %383
      %387 = vset.pattern.permute.xlu0 0
      %388 = vperm.xlu0 %387, %v367
      %v389 = vpop.permute.xlu0 %388
      %392 = vset.pattern.permute.xlu0 0
      %393 = vperm.xlu0 %392, %v368
      %v394 = vpop.permute.xlu0 %393
      %397 = vset.pattern.permute.xlu0 0
      %398 = vperm.xlu0 %397, %v369
      %v399 = vpop.permute.xlu0 %398
      %402 = vset.pattern.permute.xlu0 0
      %403 = vperm.xlu0 %402, %v370
      %v404 = vpop.permute.xlu0 %403
      %v407 = vlaneseq
      %v408 = vshrl.u32 %v407, 7
      %v409 = vsub.s32 0, %v408
      %v410 = vrot.slane %v363, %v409
      %v411 = vlaneseq
      %v412 = vshrl.u32 %v411, 7
      %v413 = vsub.s32 2, %v412
      %v414 = vrot.slane %v363, %v413
      %v417 = vlaneseq
      %v418 = vshrl.u32 %v417, 7
      %v419 = vsub.s32 0, %v418
      %v420 = vrot.slane %v410, %v419
      %v421 = vlaneseq
      %v422 = vshrl.u32 %v421, 7
      %v423 = vsub.s32 0, %v422
      %v424 = vrot.slane %v414, %v423
      %v425 = vmul.f32 %v374, %v420
      %v426 = vmul.f32 %v374, %v424
      %v427 = vmul.f32 %v379, %v420
      %v428 = vmul.f32 %v379, %v424
      %v429 = vmul.f32 %v384, %v420
      %v430 = vmul.f32 %v384, %v424
      %v431 = vmul.f32 %v389, %v420
      %v432 = vmul.f32 %v389, %v424
      %v433 = vmul.f32 %v394, %v420
      %v434 = vmul.f32 %v394, %v424
      %v435 = vmul.f32 %v399, %v420
      %v436 = vmul.f32 %v399, %v424
      %v437 = vmul.f32 %v404, %v420
      %v438 = vmul.f32 %v404, %v424
      %v439 = vld [vmem:[%s2] sm:$0xff]
      %v440 = vld [vmem:[%s2 + $0x8] sm:$0xff]
      %v441 = vld [vmem:[%s2 + $0x10] sm:$0xff]
      %v442 = vld [vmem:[%s2 + $0x18] sm:$0xff]
      %v443 = vld [vmem:[%s2 + $0x20] sm:$0xff]
      %v444 = vld [vmem:[%s2 + $0x28] sm:$0xff]
      %v445 = vld [vmem:[%s2 + $0x30] sm:$0x3]
      %447 = vset.pattern.permute.xlu0 0
      %448 = vperm.xlu0 %447, %v439
      %v449 = vpop.permute.xlu0 %448
      %452 = vset.pattern.permute.xlu0 0
      %453 = vperm.xlu0 %452, %v440
      %v454 = vpop.permute.xlu0 %453
      %457 = vset.pattern.permute.xlu0 0
      %458 = vperm.xlu0 %457, %v441
      %v459 = vpop.permute.xlu0 %458
      %462 = vset.pattern.permute.xlu0 0
      %463 = vperm.xlu0 %462, %v442
      %v464 = vpop.permute.xlu0 %463
      %467 = vset.pattern.permute.xlu0 0
      %468 = vperm.xlu0 %467, %v443
      %v469 = vpop.permute.xlu0 %468
      %472 = vset.pattern.permute.xlu0 0
      %473 = vperm.xlu0 %472, %v444
      %v474 = vpop.permute.xlu0 %473
      %477 = vset.pattern.permute.xlu0 0
      %478 = vperm.xlu0 %477, %v445
      %v479 = vpop.permute.xlu0 %478
      %v481 = vlaneseq
      %v482 = vshrl.u32 %v481, 7
      %v483 = vsub.s32 1, %v482
      %v484 = vrot.slane %v363, %v483
      %v485 = vlaneseq
      %v486 = vshrl.u32 %v485, 7
      %v487 = vsub.s32 3, %v486
      %v488 = vrot.slane %v363, %v487
      %v491 = vlaneseq
      %v492 = vshrl.u32 %v491, 7
      %v493 = vsub.s32 1, %v492
      %v494 = vrot.slane %v484, %v493
      %v495 = vlaneseq
      %v496 = vshrl.u32 %v495, 7
      %v497 = vsub.s32 1, %v496
      %v498 = vrot.slane %v488, %v497
      %v499 = vmul.f32 %v449, %v494
      %v500 = vmul.f32 %v449, %v498
      %v501 = vmul.f32 %v454, %v494
      %v502 = vmul.f32 %v454, %v498
      %v503 = vmul.f32 %v459, %v494
      %v504 = vmul.f32 %v459, %v498
      %v505 = vmul.f32 %v464, %v494
      %v506 = vmul.f32 %v464, %v498
      %v507 = vmul.f32 %v469, %v494
      %v508 = vmul.f32 %v469, %v498
      %v509 = vmul.f32 %v474, %v494
      %v510 = vmul.f32 %v474, %v498
      %v511 = vmul.f32 %v479, %v494
      %v512 = vmul.f32 %v479, %v498
      %v513 = vadd.f32 %v425, %v499
      %v514 = vadd.f32 %v426, %v500
      %v515 = vadd.f32 %v427, %v501
      %v516 = vadd.f32 %v428, %v502
      %v517 = vadd.f32 %v429, %v503
      %v518 = vadd.f32 %v430, %v504
      %v519 = vadd.f32 %v431, %v505
      %v520 = vadd.f32 %v432, %v506
      %v521 = vadd.f32 %v433, %v507
      %v522 = vadd.f32 %v434, %v508
      %v523 = vadd.f32 %v435, %v509
      %v524 = vadd.f32 %v436, %v510
      %v525 = vadd.f32 %v437, %v511
      %v526 = vadd.f32 %v438, %v512
      %v527 = vld [vmem:[%s3] sm:$0xff]
      %v528 = vld [vmem:[%s3 + $0x8] sm:$0xff]
      %v529 = vld [vmem:[%s3 + $0x10] sm:$0xff]
      %v530 = vld [vmem:[%s3 + $0x18] sm:$0xff]
      %v531 = vld [vmem:[%s3 + $0x20] sm:$0xff]
      %v532 = vld [vmem:[%s3 + $0x28] sm:$0xff]
      %v533 = vld [vmem:[%s3 + $0x30] sm:$0x3]
      %535 = vset.pattern.permute.xlu0 0
      %536 = vperm.xlu0 %535, %v527
      %v537 = vpop.permute.xlu0 %536
      %540 = vset.pattern.permute.xlu0 0
      %541 = vperm.xlu0 %540, %v528
      %v542 = vpop.permute.xlu0 %541
      %545 = vset.pattern.permute.xlu0 0
      %546 = vperm.xlu0 %545, %v529
      %v547 = vpop.permute.xlu0 %546
      %550 = vset.pattern.permute.xlu0 0
      %551 = vperm.xlu0 %550, %v530
      %v552 = vpop.permute.xlu0 %551
      %555 = vset.pattern.permute.xlu0 0
      %556 = vperm.xlu0 %555, %v531
      %v557 = vpop.permute.xlu0 %556
      %560 = vset.pattern.permute.xlu0 0
      %561 = vperm.xlu0 %560, %v532
      %v562 = vpop.permute.xlu0 %561
      %565 = vset.pattern.permute.xlu0 0
      %566 = vperm.xlu0 %565, %v533
      %v567 = vpop.permute.xlu0 %566
      %v569 = vadd.f32 %v513, %v537
      %v570 = vadd.f32 %v514, %v537
      %v571 = vadd.f32 %v515, %v542
      %v572 = vadd.f32 %v516, %v542
      %v573 = vadd.f32 %v517, %v547
      %v574 = vadd.f32 %v518, %v547
      %v575 = vadd.f32 %v519, %v552
      %v576 = vadd.f32 %v520, %v552
      %v577 = vadd.f32 %v521, %v557
      %v578 = vadd.f32 %v522, %v557
      %v579 = vadd.f32 %v523, %v562
      %v580 = vadd.f32 %v524, %v562
      %v581 = vadd.f32 %v525, %v567
      %v582 = vadd.f32 %v526, %v567
      %v583 = vtanh.pop %v569
      %v584 = vtanh.pop %v570
      %v585 = vtanh.pop %v571
      %v586 = vtanh.pop %v572
      %v587 = vtanh.pop %v573
      %v588 = vtanh.pop %v574
      %v589 = vtanh.pop %v575
      %v590 = vtanh.pop %v576
      %v591 = vtanh.pop %v577
      %v592 = vtanh.pop %v578
      %v593 = vtanh.pop %v579
      %v594 = vtanh.pop %v580
      %v595 = vtanh.pop %v581
      %v596 = vtanh.pop %v582
      %v597 = vld [vmem:[%s4] sm:$0xff]
      %v598 = vld [vmem:[%s4 + $0x8] sm:$0xff]
      %v599 = vld [vmem:[%s4 + $0x10] sm:$0xff]
      %v600 = vld [vmem:[%s4 + $0x18] sm:$0xff]
      %v601 = vld [vmem:[%s4 + $0x20] sm:$0xff]
      %v602 = vld [vmem:[%s4 + $0x28] sm:$0xff]
      %v603 = vld [vmem:[%s4 + $0x30] sm:$0x3]
      %v604 = vld [vmem:[%s5] sm:$0xff]
      %v605 = vld [vmem:[%s5 + $0x8] sm:$0xff]
      %v606 = vld [vmem:[%s5 + $0x10] sm:$0xff]
      %v607 = vld [vmem:[%s5 + $0x18] sm:$0xff]
      %v608 = vld [vmem:[%s5 + $0x20] sm:$0xff]
      %v609 = vld [vmem:[%s5 + $0x28] sm:$0xff]
      %v610 = vld [vmem:[%s5 + $0x30] sm:$0x3]
      %612 = vset.pattern.permute.xlu0 0
      %613 = vperm.xlu0 %612, %v604
      %v614 = vpop.permute.xlu0 %613
      %617 = vset.pattern.permute.xlu0 0
      %618 = vperm.xlu0 %617, %v605
      %v619 = vpop.permute.xlu0 %618
      %622 = vset.pattern.permute.xlu0 0
      %623 = vperm.xlu0 %622, %v606
      %v624 = vpop.permute.xlu0 %623
      %627 = vset.pattern.permute.xlu0 0
      %628 = vperm.xlu0 %627, %v607
      %v629 = vpop.permute.xlu0 %628
      %632 = vset.pattern.permute.xlu0 0
      %633 = vperm.xlu0 %632, %v608
      %v634 = vpop.permute.xlu0 %633
      %637 = vset.pattern.permute.xlu0 0
      %638 = vperm.xlu0 %637, %v609
      %v639 = vpop.permute.xlu0 %638
      %642 = vset.pattern.permute.xlu0 0
      %643 = vperm.xlu0 %642, %v610
      %v644 = vpop.permute.xlu0 %643
      %vm646 = vcmask 408576
      %v648 = vsel %vm646, %v597, 0
      %v651 = vsel %vm646, %v598, 0
      %v654 = vsel %vm646, %v599, 0
      %v657 = vsel %vm646, %v600, 0
      %v660 = vsel %vm646, %v601, 0
      %v663 = vsel %vm646, %v602, 0
      %v666 = vsel %vm646, %v603, 0
      %vm668 = vcmask 1041408
      %v670 = vsel %vm668, %v595, 0
      %v673 = vsel %vm668, %v596, 0
      %675 = vmatprep.subr.mxu0 %v584
      %676 = vmatpush1.msra.mxu0 %v583
      %677 = vmatprep.subr.mxu0 %v586
      %678 = vmatpush1.msra.mxu0 %v585
      %679 = vmatprep.subr.mxu0 %v588
      %680 = vmatpush1.msra.mxu0 %v587
      %681 = vmatprep.subr.mxu0 %v590
      %682 = vmatpush1.msra.mxu0 %v589
      %683 = vmatprep.subr.mxu0 %v592
      %684 = vmatpush1.msra.mxu0 %v591
      %685 = vmatprep.subr.mxu0 %v594
      %686 = vmatpush1.msra.mxu0 %v593
      %687 = vmatprep.subr.mxu0 %v673
      %688 = vmatpush1.msra.mxu0 %v670
      %689 = vmatprep.subr.mxu0 0.0
      %690 = vmatpush1.msra.mxu0 0.0
      %691 = vmatprep.subr.mxu0 0.0
      %692 = vmatpush1.msra.mxu0 0.0
      %693 = vmatprep.subr.mxu0 0.0
      %694 = vmatpush1.msra.mxu0 0.0
      %695 = vmatprep.subr.mxu0 0.0
      %696 = vmatpush1.msra.mxu0 0.0
      %697 = vmatprep.subr.mxu0 0.0
      %698 = vmatpush1.msra.mxu0 0.0
      %699 = vmatprep.subr.mxu0 0.0
      %700 = vmatpush1.msra.mxu0 0.0
      %701 = vmatprep.subr.mxu0 0.0
      %702 = vmatpush1.msra.mxu0 0.0
      %703 = vmatprep.subr.mxu0 0.0
      %704 = vmatpush1.msra.mxu0 0.0
      %705 = vmatprep.subr.mxu0 0.0
      %706 = vmatpush1.msra.mxu0 0.0
      %707 = vmatprep.subr.mxu0 0.0
      %708 = vmatpush1.msra.mxu0 0.0
      %709 = vmatprep.subr.mxu0 0.0
      %710 = vmatpush1.msra.mxu0 0.0
      %711 = vmatprep.subr.mxu0 0.0
      %712 = vmatpush1.msra.mxu0 0.0
      %713 = vmatprep.subr.mxu0 0.0
      %714 = vmatpush1.msra.mxu0 0.0
      %715 = vmatprep.subr.mxu0 0.0
      %716 = vmatpush1.msra.mxu0 0.0
      %717 = vmatprep.subr.mxu0 0.0
      %718 = vmatpush1.msra.mxu0 0.0
      %719 = vmatprep.subr.mxu0 0.0
      %720 = vmatpush1.msra.mxu0 0.0
      %721 = vmatprep.subr.mxu0 0.0
      %722 = vmatpush1.msra.mxu0 0.0
      %723 = vmatprep.subr.mxu0 0.0
      %724 = vmatpush1.msra.mxu0 0.0
      %725 = vmatprep.subr.mxu0 0.0
      %726 = vmatpush1.msra.mxu0 0.0
      %727 = vmatprep.subr.mxu0 0.0
      %728 = vmatpush1.msra.mxu0 0.0
      %729 = vmatprep.subr.mxu0 0.0
      %730 = vmatpush1.msra.mxu0 0.0
      %731 = vmatprep.subr.mxu0 0.0
      %732 = vmatpush1.msra.mxu0 0.0
      %733 = vmatprep.subr.mxu0 0.0
      %734 = vmatpush1.msra.mxu0 0.0
      %735 = vmatprep.subr.mxu0 0.0
      %736 = vmatpush1.msra.mxu0 0.0
      %737 = vmatprep.subr.mxu0 0.0
      %738 = vmatpush1.msra.mxu0 0.0
      %739 = vmatprep.mubr.f32.mxu0 0.0
      %740 = vmatmul.mubr.f32.gmra.mrb[0].mxu0 %v648
      %v741 = vpop.f32.mrb[0].mxu0
      %v742 = vadd.f32 %v614, %v741
      %v743 = vpop.f32.mrb[0].mxu0
      %v744 = vadd.f32 %v614, %v743
      %745 = vmatprep.mubr.f32.mxu0 0.0
      %746 = vmatmul.mubr.f32.gmra.mrb[0].mxu0 %v651
      %v747 = vpop.f32.mrb[0].mxu0
      %v748 = vadd.f32 %v619, %v747
      %v749 = vpop.f32.mrb[0].mxu0
      %v750 = vadd.f32 %v619, %v749
      %751 = vmatprep.mubr.f32.mxu0 0.0
      %752 = vmatmul.mubr.f32.gmra.mrb[0].mxu0 %v654
      %v753 = vpop.f32.mrb[0].mxu0
      %v754 = vadd.f32 %v624, %v753
      %v755 = vpop.f32.mrb[0].mxu0
      %v756 = vadd.f32 %v624, %v755
      %757 = vmatprep.mubr.f32.mxu0 0.0
      %758 = vmatmul.mubr.f32.gmra.mrb[0].mxu0 %v657
      %v759 = vpop.f32.mrb[0].mxu0
      %v760 = vadd.f32 %v629, %v759
      %v761 = vpop.f32.mrb[0].mxu0
      %v762 = vadd.f32 %v629, %v761
      %763 = vmatprep.mubr.f32.mxu0 0.0
      %764 = vmatmul.mubr.f32.gmra.mrb[0].mxu0 %v660
      %v765 = vpop.f32.mrb[0].mxu0
      %v766 = vadd.f32 %v634, %v765
      %v767 = vpop.f32.mrb[0].mxu0
      %v768 = vadd.f32 %v634, %v767
      %769 = vmatprep.mubr.f32.mxu0 0.0
      %770 = vmatmul.mubr.f32.gmra.mrb[0].mxu0 %v663
      %v771 = vpop.f32.mrb[0].mxu0
      %v772 = vadd.f32 %v639, %v771
      %v773 = vpop.f32.mrb[0].mxu0
      %v774 = vadd.f32 %v639, %v773
      %775 = vmatprep.mubr.f32.mxu0 0.0
      %776 = vmatmul.mubr.f32.gmra.mrb[0].mxu0 %v666
      %v777 = vpop.f32.mrb[0].mxu0
      %v778 = vadd.f32 %v644, %v777
      %v779 = vpop.f32.mrb[0].mxu0
      %v780 = vadd.f32 %v644, %v779
      %781 = vdwg.mxu0
      %v782 = vtanh.pop %v742
      %v783 = vtanh.pop %v744
      %v784 = vtanh.pop %v748
      %v785 = vtanh.pop %v750
      %v786 = vtanh.pop %v754
      %v787 = vtanh.pop %v756
      %v788 = vtanh.pop %v760
      %v789 = vtanh.pop %v762
      %v790 = vtanh.pop %v766
      %v791 = vtanh.pop %v768
      %v792 = vtanh.pop %v772
      %v793 = vtanh.pop %v774
      %v794 = vtanh.pop %v778
      %v795 = vtanh.pop %v780
      %v796 = vld [vmem:[%s6] sm:$0xff]
      %v797 = vld [vmem:[%s6 + $0x8] sm:$0xff]
      %v798 = vld [vmem:[%s6 + $0x10] sm:$0xff]
      %v799 = vld [vmem:[%s6 + $0x18] sm:$0xff]
      %v800 = vld [vmem:[%s6 + $0x20] sm:$0xff]
      %v801 = vld [vmem:[%s6 + $0x28] sm:$0xff]
      %v802 = vld [vmem:[%s6 + $0x30] sm:$0x3]
      %v803 = vld [vmem:[%s7] sm:$0xff]
      %v804 = vld [vmem:[%s7 + $0x8] sm:$0xff]
      %v805 = vld [vmem:[%s7 + $0x10] sm:$0xff]
      %v806 = vld [vmem:[%s7 + $0x18] sm:$0xff]
      %v807 = vld [vmem:[%s7 + $0x20] sm:$0xff]
      %v808 = vld [vmem:[%s7 + $0x28] sm:$0xff]
      %v809 = vld [vmem:[%s7 + $0x30] sm:$0x3]
      %811 = vset.pattern.permute.xlu0 0
      %812 = vperm.xlu0 %811, %v803
      %v813 = vpop.permute.xlu0 %812
      %816 = vset.pattern.permute.xlu0 0
      %817 = vperm.xlu0 %816, %v804
      %v818 = vpop.permute.xlu0 %817
      %821 = vset.pattern.permute.xlu0 0
      %822 = vperm.xlu0 %821, %v805
      %v823 = vpop.permute.xlu0 %822
      %826 = vset.pattern.permute.xlu0 0
      %827 = vperm.xlu0 %826, %v806
      %v828 = vpop.permute.xlu0 %827
      %831 = vset.pattern.permute.xlu0 0
      %832 = vperm.xlu0 %831, %v807
      %v833 = vpop.permute.xlu0 %832
      %836 = vset.pattern.permute.xlu0 0
      %837 = vperm.xlu0 %836, %v808
      %v838 = vpop.permute.xlu0 %837
      %841 = vset.pattern.permute.xlu0 0
      %842 = vperm.xlu0 %841, %v809
      %v843 = vpop.permute.xlu0 %842
      %v846 = vsel %vm646, %v796, 0
      %v849 = vsel %vm646, %v797, 0
      %v852 = vsel %vm646, %v798, 0
      %v855 = vsel %vm646, %v799, 0
      %v858 = vsel %vm646, %v800, 0
      %v861 = vsel %vm646, %v801, 0
      %v864 = vsel %vm646, %v802, 0
      %v867 = vsel %vm668, %v794, 0
      %v870 = vsel %vm668, %v795, 0
      %872 = vmatprep.subr.mxu0 %v783
      %873 = vmatpush1.msra.mxu0 %v782
      %874 = vmatprep.subr.mxu0 %v785
      %875 = vmatpush1.msra.mxu0 %v784
      %876 = vmatprep.subr.mxu0 %v787
      %877 = vmatpush1.msra.mxu0 %v786
      %878 = vmatprep.subr.mxu0 %v789
      %879 = vmatpush1.msra.mxu0 %v788
      %880 = vmatprep.subr.mxu0 %v791
      %881 = vmatpush1.msra.mxu0 %v790
      %882 = vmatprep.subr.mxu0 %v793
      %883 = vmatpush1.msra.mxu0 %v792
      %884 = vmatprep.subr.mxu0 %v870
      %885 = vmatpush1.msra.mxu0 %v867
      %886 = vmatprep.subr.mxu0 0.0
      %887 = vmatpush1.msra.mxu0 0.0
      %888 = vmatprep.subr.mxu0 0.0
      %889 = vmatpush1.msra.mxu0 0.0
      %890 = vmatprep.subr.mxu0 0.0
      %891 = vmatpush1.msra.mxu0 0.0
      %892 = vmatprep.subr.mxu0 0.0
      %893 = vmatpush1.msra.mxu0 0.0
      %894 = vmatprep.subr.mxu0 0.0
      %895 = vmatpush1.msra.mxu0 0.0
      %896 = vmatprep.subr.mxu0 0.0
      %897 = vmatpush1.msra.mxu0 0.0
      %898 = vmatprep.subr.mxu0 0.0
      %899 = vmatpush1.msra.mxu0 0.0
      %900 = vmatprep.subr.mxu0 0.0
      %901 = vmatpush1.msra.mxu0 0.0
      %902 = vmatprep.subr.mxu0 0.0
      %903 = vmatpush1.msra.mxu0 0.0
      %904 = vmatprep.subr.mxu0 0.0
      %905 = vmatpush1.msra.mxu0 0.0
      %906 = vmatprep.subr.mxu0 0.0
      %907 = vmatpush1.msra.mxu0 0.0
      %908 = vmatprep.subr.mxu0 0.0
      %909 = vmatpush1.msra.mxu0 0.0
      %910 = vmatprep.subr.mxu0 0.0
      %911 = vmatpush1.msra.mxu0 0.0
      %912 = vmatprep.subr.mxu0 0.0
      %913 = vmatpush1.msra.mxu0 0.0
      %914 = vmatprep.subr.mxu0 0.0
      %915 = vmatpush1.msra.mxu0 0.0
      %916 = vmatprep.subr.mxu0 0.0
      %917 = vmatpush1.msra.mxu0 0.0
      %918 = vmatprep.subr.mxu0 0.0
      %919 = vmatpush1.msra.mxu0 0.0
      %920 = vmatprep.subr.mxu0 0.0
      %921 = vmatpush1.msra.mxu0 0.0
      %922 = vmatprep.subr.mxu0 0.0
      %923 = vmatpush1.msra.mxu0 0.0
      %924 = vmatprep.subr.mxu0 0.0
      %925 = vmatpush1.msra.mxu0 0.0
      %926 = vmatprep.subr.mxu0 0.0
      %927 = vmatpush1.msra.mxu0 0.0
      %928 = vmatprep.subr.mxu0 0.0
      %929 = vmatpush1.msra.mxu0 0.0
      %930 = vmatprep.subr.mxu0 0.0
      %931 = vmatpush1.msra.mxu0 0.0
      %932 = vmatprep.subr.mxu0 0.0
      %933 = vmatpush1.msra.mxu0 0.0
      %934 = vmatprep.subr.mxu0 0.0
      %935 = vmatpush1.msra.mxu0 0.0
      %936 = vmatprep.mubr.f32.mxu0 0.0
      %937 = vmatmul.mubr.f32.gmra.mrb[0].mxu0 %v846
      %v938 = vpop.f32.mrb[0].mxu0
      %v939 = vadd.f32 %v813, %v938
      %v940 = vpop.f32.mrb[0].mxu0
      %v941 = vadd.f32 %v813, %v940
      %942 = vmatprep.mubr.f32.mxu0 0.0
      %943 = vmatmul.mubr.f32.gmra.mrb[0].mxu0 %v849
      %v944 = vpop.f32.mrb[0].mxu0
      %v945 = vadd.f32 %v818, %v944
      %v946 = vpop.f32.mrb[0].mxu0
      %v947 = vadd.f32 %v818, %v946
      %948 = vmatprep.mubr.f32.mxu0 0.0
      %949 = vmatmul.mubr.f32.gmra.mrb[0].mxu0 %v852
      %v950 = vpop.f32.mrb[0].mxu0
      %v951 = vadd.f32 %v823, %v950
      %v952 = vpop.f32.mrb[0].mxu0
      %v953 = vadd.f32 %v823, %v952
      %954 = vmatprep.mubr.f32.mxu0 0.0
      %955 = vmatmul.mubr.f32.gmra.mrb[0].mxu0 %v855
      %v956 = vpop.f32.mrb[0].mxu0
      %v957 = vadd.f32 %v828, %v956
      %v958 = vpop.f32.mrb[0].mxu0
      %v959 = vadd.f32 %v828, %v958
      %960 = vmatprep.mubr.f32.mxu0 0.0
      %961 = vmatmul.mubr.f32.gmra.mrb[0].mxu0 %v858
      %v962 = vpop.f32.mrb[0].mxu0
      %v963 = vadd.f32 %v833, %v962
      %v964 = vpop.f32.mrb[0].mxu0
      %v965 = vadd.f32 %v833, %v964
      %966 = vmatprep.mubr.f32.mxu0 0.0
      %967 = vmatmul.mubr.f32.gmra.mrb[0].mxu0 %v861
      %v968 = vpop.f32.mrb[0].mxu0
      %v969 = vadd.f32 %v838, %v968
      %v970 = vpop.f32.mrb[0].mxu0
      %v971 = vadd.f32 %v838, %v970
      %972 = vmatprep.mubr.f32.mxu0 0.0
      %973 = vmatmul.mubr.f32.gmra.mrb[0].mxu0 %v864
      %v974 = vpop.f32.mrb[0].mxu0
      %v975 = vadd.f32 %v843, %v974
      %v976 = vpop.f32.mrb[0].mxu0
      %v977 = vadd.f32 %v843, %v976
      %978 = vdwg.mxu0
      %v979 = vtanh.pop %v939
      %v980 = vtanh.pop %v941
      %v981 = vtanh.pop %v945
      %v982 = vtanh.pop %v947
      %v983 = vtanh.pop %v951
      %v984 = vtanh.pop %v953
      %v985 = vtanh.pop %v957
      %v986 = vtanh.pop %v959
      %v987 = vtanh.pop %v963
      %v988 = vtanh.pop %v965
      %v989 = vtanh.pop %v969
      %v990 = vtanh.pop %v971
      %v991 = vtanh.pop %v975
      %v992 = vtanh.pop %v977
      %v993 = vld [vmem:[%s8] sm:$0xff]
      %v994 = vld [vmem:[%s8 + $0x8] sm:$0xff]
      %v995 = vld [vmem:[%s8 + $0x10] sm:$0xff]
      %v996 = vld [vmem:[%s8 + $0x18] sm:$0xff]
      %v997 = vld [vmem:[%s8 + $0x20] sm:$0xff]
      %v998 = vld [vmem:[%s8 + $0x28] sm:$0xff]
      %v999 = vld [vmem:[%s8 + $0x30] sm:$0x3]
      %1001 = vset.pattern.permute.xlu0 0
      %1002 = vperm.xlu0 %1001, %v993
      %v1003 = vpop.permute.xlu0 %1002
      %1006 = vset.pattern.permute.xlu0 0
      %1007 = vperm.xlu0 %1006, %v994
      %v1008 = vpop.permute.xlu0 %1007
      %1011 = vset.pattern.permute.xlu0 0
      %1012 = vperm.xlu0 %1011, %v995
      %v1013 = vpop.permute.xlu0 %1012
      %1016 = vset.pattern.permute.xlu0 0
      %1017 = vperm.xlu0 %1016, %v996
      %v1018 = vpop.permute.xlu0 %1017
      %1021 = vset.pattern.permute.xlu0 0
      %1022 = vperm.xlu0 %1021, %v997
      %v1023 = vpop.permute.xlu0 %1022
      %1026 = vset.pattern.permute.xlu0 0
      %1027 = vperm.xlu0 %1026, %v998
      %v1028 = vpop.permute.xlu0 %1027
      %1031 = vset.pattern.permute.xlu0 0
      %1032 = vperm.xlu0 %1031, %v999
      %v1033 = vpop.permute.xlu0 %1032
      %v1035 = vmul.f32 %v979, %v1003
      %v1036 = vmul.f32 %v980, %v1003
      %v1037 = vmul.f32 %v981, %v1008
      %v1038 = vmul.f32 %v982, %v1008
      %v1039 = vmul.f32 %v983, %v1013
      %v1040 = vmul.f32 %v984, %v1013
      %v1041 = vmul.f32 %v985, %v1018
      %v1042 = vmul.f32 %v986, %v1018
      %v1043 = vmul.f32 %v987, %v1023
      %v1044 = vmul.f32 %v988, %v1023
      %v1045 = vmul.f32 %v989, %v1028
      %v1046 = vmul.f32 %v990, %v1028
      %v1047 = vmul.f32 %v991, %v1033
      %v1048 = vmul.f32 %v992, %v1033
      %v1049 = vadd.f32 %v1035, %v1037
      %v1050 = vadd.f32 %v1049, %v1039
      %v1051 = vadd.f32 %v1050, %v1041
      %v1052 = vadd.f32 %v1051, %v1043
      %v1053 = vadd.f32 %v1052, %v1045
      %v1054 = vsel %vm668, %v1047, 0.0
      %v1055 = vadd.f32 %v1053, %v1054
      %v1056 = vrot.slane %v1055, 4
      %v1057 = vadd.f32 %v1055, %v1056
      %v1058 = vrot.slane %v1057, 2
      %v1059 = vadd.f32 %v1057, %v1058
      %v1060 = vrot.slane %v1059, 1
      %v1061 = vadd.f32 %v1059, %v1060
      %v1062 = vadd.f32 %v1036, %v1038
      %v1063 = vadd.f32 %v1062, %v1040
      %v1064 = vadd.f32 %v1063, %v1042
      %v1065 = vadd.f32 %v1064, %v1044
      %v1066 = vadd.f32 %v1065, %v1046
      %v1067 = vsel %vm668, %v1048, 0.0
      %v1068 = vadd.f32 %v1066, %v1067
      %v1069 = vrot.slane %v1068, 4
      %v1070 = vadd.f32 %v1068, %v1069
      %v1071 = vrot.slane %v1070, 2
      %v1072 = vadd.f32 %v1070, %v1071
      %v1073 = vrot.slane %v1072, 1
      %v1074 = vadd.f32 %v1072, %v1073
      %v1075 = vld [vmem:[#allocation2] sm:$0x1]
      %1077 = vset.pattern.permute.xlu0 0
      %1078 = vperm.xlu0 %1077, %v1075
      %v1079 = vpop.permute.xlu0 %1078
      %v1081 = vlaneseq
      %v1082 = vshrl.u32 %v1081, 7
      %v1083 = vsub.s32 0, %v1082
      %v1084 = vrot.slane %v1079, %v1083
      %v1085 = vadd.f32 %v1061, %v1084
      %v1086 = vadd.f32 %v1074, %v1084
      %v1089 = vcombine.low %v1085, %v1086
      %v1091 = vunpack.c.l.s4 1966171168
      %v1092 = vunpack.c.0.s8 %v1091
      %v1093 = vlaneseq
      %v1094 = vshrl.u32 %v1093, 7
      %v1095 = vsub.s32 %v1092, %v1094
      %v1096 = vrot.slane %v1089, %v1095
      %v1098 = vunpack.c.l.s4 1966171168
      %v1099 = vunpack.c.0.s8 %v1098
      %v1100 = vlaneseq
      %v1101 = vshrl.u32 %v1100, 7
      %v1102 = vsub.s32 %v1099, %v1101
      %v1103 = vrot.slane %v1096, %v1102
      %v1105 = vlaneseq
      %vm1106 = vcmp.ge.s32.totalorder %v1105, 0
      %vm1107 = vcmp.lt.s32.totalorder %v1105, 256
      %vm1108 = vmand %vm1106, %vm1107
      %1109 = vst.msk [vmem:[%s361] sm:$0x3] %vm1108, %v1103
      %s1110 = smul.u32 2, %s23
      %p1111 = scmp.lt.s32.totalorder %s1110, 3
      %s1112 = scalar_select %p1111, %s1110, 3
      %s1113 = scalar_lea.vmem %s10, %s1112
      // Predicated region
      $region61: #{eos_mlp_forward.1} parent=59 // pred_check
        %p1114 = pneg %p256
      $region62: #{eos_mlp_forward.1} parent=59 // pred_check_branch
        %1116 = sbr.rel (%p1114) target = $region64
      $region63: #{eos_mlp_forward.1} parent=59 // pred_region
        %s1117 = smul.u32 2, %s23
      $region64: #{eos_mlp_forward.1} parent=59 // pred_fallthru
        _
    $region60: #{eos_mlp_forward.1} parent=5 // pred_fallthru
      _
    %p1118 = scmp.le.s32.totalorder 2, %s18
    // Predicated region
    $region65: #{eos_mlp_forward.1} parent=5 // pred_check
      %p1119 = pneg %p1118
    $region66: #{eos_mlp_forward.1} parent=5 // pred_check_branch
      %1121 = sbr.rel (%p1119) target = $region68
    $region67: #{eos_mlp_forward.1} parent=5 // pred_region
      %s1122 = ssub.s32 %s18, 2
      // Predicated region
      $region69: #{eos_mlp_forward.1} parent=67 // pred_check
        %p1123 = pneg %p262
      $region70: #{eos_mlp_forward.1} parent=67 // pred_check_branch
        %1125 = sbr.rel (%p1123) target = $region72
      $region71: #{eos_mlp_forward.1} parent=67 // pred_region
        %s1126 = smul.u32 2, %s24
        %p1127 = scmp.lt.s32.totalorder %s1126, 3
        %s1128 = scalar_select %p1127, %s1126, 3
        %s1129 = scalar_lea.vmem %s10, %s1128
      $region72: #{eos_mlp_forward.1} parent=67 // pred_fallthru
        _
    $region68: #{eos_mlp_forward.1} parent=5 // pred_fallthru
      _
  $region6: #{eos_mlp_forward.1} parent=0 // loop_footer
    %s22 = sadd.s32 1, %s18
  $region7: #{eos_mlp_forward.1} parent=0 // loop_footer_branch
    %17 = sbr.rel target = $region3
  $region8: #{eos_mlp_forward.1} parent=0 // loop_exit
    _

</llo_original>
